<compile_context>
chip_gen: v7x
topology: tpu7x:2x2x1
jax: 0.10.0
libtpu: 0.0.40
codegen_flags: <defaults>
</compile_context>

<pallas_src>
import functools

import jax
import jax.numpy as jnp
from jax.experimental import pallas as pl
from jax.experimental.pallas import tpu as pltpu


def _ls_ce_kernel(logits_ref, tgt_ref, out_ref, *, smooth_val, confidence,
                  ignore_index, n_rows, row_tile):
    i = pl.program_id(0)

    logits = logits_ref[...].astype(jnp.float32)            # (tn, C)
    tgt = tgt_ref[...]                                       # (tn, 1) int32

    # Algebraic split of the label-smoothed weighted sum:
    #   sum_c w_c * x_c = smooth * sum_c x_c + (conf - smooth) * x[tgt]
    # Both lane reductions run on the XLU (separate VLIW slot from the VALU);
    # per-element VALU work is just iota + compare + select to extract x[tgt].
    row_sum = jnp.sum(logits, axis=-1, keepdims=True)        # (tn, 1)
    col = jax.lax.broadcasted_iota(jnp.int32, logits.shape, 1)
    tgt_logit = jnp.sum(jnp.where(col == tgt, logits, jnp.float32(0.0)),
                        axis=-1, keepdims=True)              # (tn, 1)
    row_dot = (jnp.float32(smooth_val) * row_sum
               + jnp.float32(confidence - smooth_val) * tgt_logit)

    # Mask rows past the true row count (tail block reads padded garbage) and
    # rows whose target is the ignore_index (padding tokens).
    row = jax.lax.broadcasted_iota(jnp.int32, tgt.shape, 0)
    in_range = (i * row_tile + row) < n_rows
    valid = jnp.logical_and(in_range, tgt != ignore_index)

    out_ref[...] = jnp.where(valid, -row_dot, jnp.float32(0.0))


def _pick_row_tile(n_rows, num_cls, itemsize, budget_bytes=8 * 1024 * 1024):
    """Largest multiple-of-8 row tile whose single logits buffer fits budget."""
    rows_fit = budget_bytes // max(1, num_cls * itemsize)
    rows_fit = max(8, (rows_fit // 8) * 8)
    rows_fit = min(rows_fit, 4096)               # diminishing returns beyond this
    n_rounded = pl.cdiv(n_rows, 8) * 8
    return min(rows_fit, n_rounded)


def label_smoothed_cross_entropy(logits, targets, *, num_classes, smoothing,
                                 ignore_index, reduction="sum", row_tile=None):
    """logits: (B, S_l, C) float (log-shaped scores), targets: (B, S_t) int."""
    if smoothing <= 0.0:
        # TODO(synk): smoothing == 0 falls back to F.cross_entropy; not implemented here.
        raise NotImplementedError("only the smoothing > 0 branch is implemented")

    confidence = 1.0 - smoothing
    # NOTE: like the PyTorch module, smooth_val uses the `num_classes` argument
    # (assumed consistent with logits.shape[-1]).
    smooth_val = smoothing / (num_classes - 1)

    # --- glue: length truncation + flatten (plain JAX, no copies of logits) ---
    max_len = min(logits.shape[1], targets.shape[1])
    logits = logits[:, :max_len, :]
    targets = targets[:, :max_len]

    C = logits.shape[-1]
    logits = logits.reshape(-1, C)                       # keep incoming dtype
    targets = targets.reshape(-1, 1).astype(jnp.int32)
    n = logits.shape[0]

    if reduction == "sum":
        scale = 1.0
    elif reduction == "mean":
        scale = 1.0 / float(n * C)                       # torch.mean over all N*C
    else:
        raise ValueError(f"Unsupported reduction method {reduction}")

    itemsize = jnp.dtype(logits.dtype).itemsize
    if row_tile is None:
        tn = _pick_row_tile(n, C, itemsize)
    else:
        assert row_tile % 8 == 0, "row_tile must be a multiple of 8"
        tn = int(row_tile)

    grid = (pl.cdiv(n, tn),)

    kernel = functools.partial(
        _ls_ce_kernel,
        smooth_val=float(smooth_val),
        confidence=float(confidence),
        ignore_index=int(ignore_index),
        n_rows=int(n),
        row_tile=int(tn),
    )

    per_row = pl.pallas_call(
        kernel,
        out_shape=jax.ShapeDtypeStruct((n, 1), jnp.float32),
        grid_spec=pltpu.PrefetchScalarGridSpec(
            num_scalar_prefetch=0,
            grid=grid,
            in_specs=[
                pl.BlockSpec((tn, C), lambda i: (i, 0)),
                pl.BlockSpec((tn, 1), lambda i: (i, 0)),
            ],
            out_specs=pl.BlockSpec((tn, 1), lambda i: (i, 0)),
        ),
        compiler_params=pltpu.CompilerParams(
            dimension_semantics=("parallel",),
            vmem_limit_bytes=32 * 1024 * 1024,
        ),
    )(logits, targets)

    # Tiny final reduction + scale in plain JAX (better accumulation accuracy
    # than a serialized scalar accumulator, and keeps the grid parallel).
    loss = jnp.sum(per_row)
    if scale != 1.0:
        loss = loss * jnp.float32(scale)
    return loss


def _reference(logits, targets, *, num_classes, smoothing, ignore_index,
               reduction):
    """Pure-JAX reference matching the PyTorch forward (smoothing > 0)."""
    confidence = 1.0 - smoothing
    max_len = min(logits.shape[1], targets.shape[1])
    logits = logits[:, :max_len, :].reshape(-1, logits.shape[-1])
    logits = logits.astype(jnp.float32)
    targets = targets[:, :max_len].reshape(-1)
    ls = jnp.full_like(logits, smoothing / (num_classes - 1))
    ls = ls.at[jnp.arange(targets.shape[0]), targets].set(confidence)
    ls = jnp.where((targets == ignore_index)[:, None], 0.0, ls)
    val = -ls * logits
    return jnp.sum(val) if reduction == "sum" else jnp.mean(val)


if __name__ == "__main__":
    key = jax.random.PRNGKey(0)
    k1, k2 = jax.random.split(key)

    batch, logits_len, target_len, num_classes = 3, 10, 7, 32
    smoothing = 0.1
    ignore_index = 0          # vocab.pad_id

    logits = jax.random.normal(k1, (batch, logits_len, num_classes),
                               dtype=jnp.float32)
    targets = jax.random.randint(k2, (batch, target_len), 0, num_classes,
                                 dtype=jnp.int32)
    # make a couple of positions padding so the ignore_index path is exercised
    targets = targets.at[0, -1].set(ignore_index)
    targets = targets.at[1, 3].set(ignore_index)

    ok = True
    for reduction in ("sum", "mean"):
        ref = _reference(logits, targets, num_classes=num_classes,
                         smoothing=smoothing, ignore_index=ignore_index,
                         reduction=reduction)

        # auto tile (single block) and forced small tile (multi-block with a
        # partial tail block -> exercises the in-kernel row mask)
        for rt in (None, 8):
            loss = label_smoothed_cross_entropy(
                logits, targets,
                num_classes=num_classes, smoothing=smoothing,
                ignore_index=ignore_index, reduction=reduction, row_tile=rt)
            loss = jax.block_until_ready(loss)
            ok &= bool(jnp.allclose(loss, ref, rtol=1e-5, atol=1e-5))

        # bf16 input path: logits DMA'd as bf16, cast to f32 inside the kernel
        loss_bf16 = label_smoothed_cross_entropy(
            logits.astype(jnp.bfloat16), targets,
            num_classes=num_classes, smoothing=smoothing,
            ignore_index=ignore_index, reduction=reduction)
        loss_bf16 = jax.block_until_ready(loss_bf16)
        ref_bf16 = _reference(logits.astype(jnp.bfloat16), targets,
                              num_classes=num_classes, smoothing=smoothing,
                              ignore_index=ignore_index, reduction=reduction)
        ok &= bool(jnp.allclose(loss_bf16, ref_bf16, rtol=1e-4, atol=1e-4))

    assert ok
    print("KERNEL_OK")
</pallas_src>

<mosaic_0001>
module attributes {stable_mosaic.version = 11 : i64} {
  func.func @_ls_ce_kernel(%arg0: i32, %arg1: memref<24x32xf32, #tpu.memory_space<vmem>>, %arg2: memref<24x1xi32, #tpu.memory_space<vmem>>, %arg3: memref<24x1xf32, #tpu.memory_space<vmem>>) attributes {dimension_semantics = [#tpu.dimension_semantics<parallel>], iteration_bounds = array<i64: 1>, scalar_prefetch = 0 : i64, scratch_operands = 0 : i64, tpu.core_type = #tpu.core_type<tc>, window_params = [{transform_indices = @transform_0, window_bounds = array<i64: 24, 32>}, {transform_indices = @transform_1, window_bounds = array<i64: 24, 1>}, {transform_indices = @transform_2, window_bounds = array<i64: 24, 1>}]} {
    %c0 = arith.constant 0 : index
    %c0_0 = arith.constant 0 : index
    %0 = vector.load %arg1[%c0, %c0_0] : memref<24x32xf32, #tpu.memory_space<vmem>>, vector<24x32xf32>
    %c0_1 = arith.constant 0 : index
    %c0_2 = arith.constant 0 : index
    %1 = vector.load %arg2[%c0_1, %c0_2] : memref<24x1xi32, #tpu.memory_space<vmem>>, vector<24x1xi32>
    %cst = arith.constant dense<0.000000e+00> : vector<24xf32>
    %2 = vector.multi_reduction <add>, %0, %cst [1] : vector<24x32xf32> to vector<24xf32>
    %3 = vector.shape_cast %2 : vector<24xf32> to vector<24x1xf32>
    %4 = tpu.iota {dimensions = array<i32: 1>} : vector<24x32xi32>
    %5 = vector.broadcast %1 : vector<24x1xi32> to vector<24x32xi32>
    %6 = arith.cmpi eq, %4, %5 : vector<24x32xi32>
    %cst_3 = arith.constant 0.000000e+00 : f32
    %7 = vector.broadcast %cst_3 : f32 to vector<24x32xf32>
    %8 = arith.select %6, %0, %7 : vector<24x32xi1>, vector<24x32xf32>
    %cst_4 = arith.constant dense<0.000000e+00> : vector<24xf32>
    %9 = vector.multi_reduction <add>, %8, %cst_4 [1] : vector<24x32xf32> to vector<24xf32>
    %10 = vector.shape_cast %9 : vector<24xf32> to vector<24x1xf32>
    %cst_5 = arith.constant 0.0032258064 : f32
    %11 = vector.broadcast %cst_5 : f32 to vector<24x1xf32>
    %12 = arith.mulf %11, %3 : vector<24x1xf32>
    %cst_6 = arith.constant 0.896774172 : f32
    %13 = vector.broadcast %cst_6 : f32 to vector<24x1xf32>
    %14 = arith.mulf %13, %10 : vector<24x1xf32>
    %15 = arith.addf %12, %14 : vector<24x1xf32>
    %16 = tpu.iota {dimensions = array<i32: 0>} : vector<24x1xi32>
    %c24_i32 = arith.constant 24 : i32
    %17 = arith.muli %arg0, %c24_i32 : i32
    %18 = vector.broadcast %17 : i32 to vector<24x1xi32>
    %19 = arith.addi %18, %16 : vector<24x1xi32>
    %c21_i32 = arith.constant 21 : i32
    %20 = vector.broadcast %c21_i32 : i32 to vector<24x1xi32>
    %21 = arith.cmpi slt, %19, %20 : vector<24x1xi32>
    %c0_i32 = arith.constant 0 : i32
    %22 = vector.broadcast %c0_i32 : i32 to vector<24x1xi32>
    %23 = arith.cmpi ne, %1, %22 : vector<24x1xi32>
    %24 = arith.andi %21, %23 : vector<24x1xi1>
    %cst_7 = arith.constant 0.000000e+00 : f32
    %25 = vector.broadcast %cst_7 : f32 to vector<24x1xf32>
    %26 = arith.subf %25, %15 : vector<24x1xf32>
    %cst_8 = arith.constant 0.000000e+00 : f32
    %27 = vector.broadcast %cst_8 : f32 to vector<24x1xf32>
    %28 = arith.select %24, %26, %27 : vector<24x1xi1>, vector<24x1xf32>
    %c0_9 = arith.constant 0 : index
    %c0_10 = arith.constant 0 : index
    %29 = vector.load %arg3[%c0_9, %c0_10] : memref<24x1xf32, #tpu.memory_space<vmem>>, vector<24x1xf32>
    tpu.vector_store %arg3[%c0_9, %c0_10], %28 {strides = array<i32>} : memref<24x1xf32, #tpu.memory_space<vmem>>, vector<24x1xf32>,
    return
  }
  func.func @transform_0(%arg0: i32) -> (i32, i32) {
    %c0_i32 = arith.constant 0 : i32
    %c0_i32_0 = arith.constant 0 : i32
    return %arg0, %c0_i32 : i32, i32
  }
  func.func @transform_1(%arg0: i32) -> (i32, i32) {
    %c0_i32 = arith.constant 0 : i32
    %c0_i32_0 = arith.constant 0 : i32
    return %arg0, %c0_i32 : i32, i32
  }
  func.func @transform_2(%arg0: i32) -> (i32, i32) {
    %c0_i32 = arith.constant 0 : i32
    %c0_i32_0 = arith.constant 0 : i32
    return %arg0, %c0_i32 : i32, i32
  }
}

</mosaic_0001>

<llo_original>
// kernel: tpu_custom_call.1
$region0: #{tpu_custom_call.1}
  #allocation0 [shape = 'u32[]', space=smem, size = 0x4, offset = 0x4, fixed_abs, tag = 'smem constant byte address 0x4 - core index']
  #allocation1 [shape = 'u32[144,128]{1,0:T(1,128)}', space=vmem, size = 0x12000, scoped, tag = 'internal scratch']
  %s0 = inlined_call_operand.vmem [shape: f32[21,32], index: 0, kind: input, shape index: {}]
  %s1 = inlined_call_operand.vmem [shape: s32[21,1], index: 1, kind: input, shape index: {}]
  %s2 = inlined_call_operand.vmem [shape: f32[21,1], index: 2, kind: output, shape index: {}]
  %s3 = sld [smem:[#allocation0]]
  $region18: #{tpu_custom_call.1} parent=0
    _
  %s5 = ssub.s32 1, %s3
  %s6 = scalar_select 0, %s5, %s3
  // Predicated region
  $region2: #{tpu_custom_call.1} parent=0 // pred_check
    _
  $region3: #{tpu_custom_call.1} parent=0 // pred_check_branch
    %8 = sbr.rel (0) target = $region5
  $region4: #{tpu_custom_call.1} parent=0 // pred_region
    _
  $region5: #{tpu_custom_call.1} parent=0 // pred_fallthru
    _
  // Predicated region
  $region6: #{tpu_custom_call.1} parent=0 // pred_check
    _
  $region7: #{tpu_custom_call.1} parent=0 // pred_check_branch
    %10 = sbr.rel (0) target = $region9
  $region8: #{tpu_custom_call.1} parent=0 // pred_region
    _
  $region9: #{tpu_custom_call.1} parent=0 // pred_fallthru
    _
  %v11 = vld [vmem:[%s0] sm:$0xff]
  %v12 = vld [vmem:[%s0 + $0x8] sm:$0xff]
  %v13 = vld [vmem:[%s0 + $0x10] sm:$0xff]
  %v14 = vld [vmem:[%s1] sm:$0xff]
  %v15 = vld [vmem:[%s1 + $0x8] sm:$0xff]
  %v16 = vld [vmem:[%s1 + $0x10] sm:$0xff]
  %vm17 = vcmask 261120
  %v18 = vsel %vm17, %v11, 0.0
  %19 = vadd.xlane.f32.xlu0 %v18
  %v20 = vpop.xlane.xlu0 %19
  %v21 = vsel %vm17, %v12, 0.0
  %22 = vadd.xlane.f32.xlu0 %v21
  %v23 = vpop.xlane.xlu0 %22
  %v24 = vsel %vm17, %v13, 0.0
  %25 = vadd.xlane.f32.xlu0 %v24
  %v26 = vpop.xlane.xlu0 %25
  %v27 = vlaneseq
  %v28 = vand.u32 %v27, 127
  %29 = vset.pattern.permute.xlu0 0
  %30 = vperm.xlu0 %29, %v14
  %v31 = vpop.permute.xlu0 %30
  %32 = vset.pattern.permute.xlu0 0
  %33 = vperm.xlu0 %32, %v15
  %v34 = vpop.permute.xlu0 %33
  %35 = vset.pattern.permute.xlu0 0
  %36 = vperm.xlu0 %35, %v16
  %v37 = vpop.permute.xlu0 %36
  %vm38 = vcmp.eq.s32.totalorder %v28, %v31
  %vm39 = vcmp.eq.s32.totalorder %v28, %v34
  %vm40 = vcmp.eq.s32.totalorder %v28, %v37
  %v41 = vsel %vm38, %v11, 0.0
  %v42 = vsel %vm39, %v12, 0.0
  %v43 = vsel %vm40, %v13, 0.0
  %v44 = vsel %vm17, %v41, 0.0
  %45 = vadd.xlane.f32.xlu0 %v44
  %v46 = vpop.xlane.xlu0 %45
  %v47 = vsel %vm17, %v42, 0.0
  %48 = vadd.xlane.f32.xlu0 %v47
  %v49 = vpop.xlane.xlu0 %48
  %v50 = vsel %vm17, %v43, 0.0
  %51 = vadd.xlane.f32.xlu0 %v50
  %v52 = vpop.xlane.xlu0 %51
  %v53 = vmul.f32 %v20, 0.0032258064
  %v54 = vmul.f32 %v23, 0.0032258064
  %v55 = vmul.f32 %v26, 0.0032258064
  %v56 = vmul.f32 %v46, 0.8967742
  %v57 = vmul.f32 %v49, 0.8967742
  %v58 = vmul.f32 %v52, 0.8967742
  %v59 = vadd.f32 %v53, %v56
  %v60 = vadd.f32 %v54, %v57
  %v61 = vadd.f32 %v55, %v58
  %v62 = vlaneseq
  %v63 = vshrl.u32 %v62, 7
  %v64 = vadd.s32 %v63, 8
  %v65 = vadd.s32 %v63, 16
  %s66 = smul.u32 0, 24
  %v67 = vstv %s66
  %v68 = vadd.s32 %v67, %v63
  %v69 = vadd.s32 %v67, %v64
  %v70 = vadd.s32 %v67, %v65
  %vm71 = vcmp.lt.s32.totalorder %v68, 21
  %vm72 = vcmp.lt.s32.totalorder %v69, 21
  %vm73 = vcmp.lt.s32.totalorder %v70, 21
  %vm74 = vcmp.ne.s32.totalorder %v14, 0
  %vm75 = vcmp.ne.s32.totalorder %v15, 0
  %vm76 = vcmp.ne.s32.totalorder %v16, 0
  %vm77 = vmand %vm71, %vm74
  %vm78 = vmand %vm72, %vm75
  %vm79 = vmand %vm73, %vm76
  %v80 = vsub.f32 0.0, %v59
  %v81 = vsub.f32 0.0, %v60
  %v82 = vsub.f32 0.0, %v61
  %v83 = vsel %vm77, %v80, 0.0
  %v84 = vsel %vm78, %v81, 0.0
  %v85 = vsel %vm79, %v82, 0.0
  %vm86 = vcmask 7168
  %87 = vst.msk [vmem:[%s2] sm:$0xff] %vm86, %v83
  %88 = vst.msk [vmem:[%s2 + $0x8] sm:$0xff] %vm86, %v84
  %89 = vst.msk [vmem:[%s2 + $0x10] sm:$0xff] %vm86, %v85
  // Predicated region
  $region10: #{tpu_custom_call.1} parent=0 // pred_check
    _
  $region11: #{tpu_custom_call.1} parent=0 // pred_check_branch
    %91 = sbr.rel (0) target = $region13
  $region12: #{tpu_custom_call.1} parent=0 // pred_region
    _
  $region13: #{tpu_custom_call.1} parent=0 // pred_fallthru
    _
  // Predicated region
  $region14: #{tpu_custom_call.1} parent=0 // pred_check
    _
  $region15: #{tpu_custom_call.1} parent=0 // pred_check_branch
    %93 = sbr.rel (0) target = $region17
  $region16: #{tpu_custom_call.1} parent=0 // pred_region
    _
  $region17: #{tpu_custom_call.1} parent=0 // pred_fallthru
    _

</llo_original>
